<compile_context>
chip_gen: v6e
topology: v6e:2x2x1
jax: 0.10.0
libtpu: 0.0.40
codegen_flags: <defaults>
</compile_context>

<pallas_src>
import jax
import jax.numpy as jnp
import numpy as np
from jax.experimental import pallas as pl
from jax.experimental.pallas import tpu as pltpu


def _round_up(x: int, m: int) -> int:
    return ((x + m - 1) // m) * m


def _vmem_budgets():
    """(per-step working-set budget, scoped vmem limit) in bytes, per chip."""
    try:
        cap = pltpu.get_tpu_info().vmem_capacity_bytes
    except Exception:
        cap = 64 * 1024 * 1024          # conservative (v7x-sized) default
    if cap >= 96 * 1024 * 1024:         # v5e / v6e: 128 MiB physical VMEM
        return 24 * 1024 * 1024, 64 * 1024 * 1024
    # v7x: 64 MiB per TensorCore -> stay conservative
    return 12 * 1024 * 1024, 40 * 1024 * 1024


def make_tv_loss(eps: float = 0.001, beta: int = 2):
    """Returns a callable computing the TVLoss forward pass.

    `beta` is kept for parity with the PyTorch __init__ but (like the
    reference module) is unused in forward.
    """
    del beta  # unused in the reference forward pass

    def tv_loss(x: jax.Array) -> jax.Array:
        assert x.ndim == 4, "expected NCHW input"
        b, c, h, w = x.shape
        assert h >= 2 and w >= 2, "TV loss needs H >= 2 and W >= 2"

        n = b * c                     # independent images
        l = h * w                     # flattened, lane-major spatial axis
        l_pad = _round_up(l, 128)     # lane-dense (multiple of 128)

        xf = x.reshape(n, l)
        if l_pad != l:
            # Only pad the lane axis when strictly required (no row pad).
            xf = jnp.pad(xf, ((0, 0), (0, l_pad - l)))

        # --- tile sizing against the real per-step working set -------------
        ws_budget, vmem_limit = _vmem_budgets()
        itemsize = xf.dtype.itemsize
        # double-buffered input block + ~5 block-sized f32 temporaries
        # (f32 upcast, two full-width rolls, diffs / clipped squares).
        bytes_per_row = l_pad * (2 * itemsize + 5 * 4)
        tn = max(8, (ws_budget // bytes_per_row) // 8 * 8)
        tn = min(tn, _round_up(n, 8))          # multiple of 8 sublanes

        total_blocks = int(pl.cdiv(n, tn))
        n_split = 2                            # v7x: one half per TensorCore
        bpc = int(pl.cdiv(total_blocks, n_split))   # inner (reduction) steps
        grid = (n_split, bpc)

        count = n * (h - 1) * (w - 1)
        # Positive-shift equivalents of roll(-1) / roll(-W): neighbour ahead.
        shift_right = (l_pad - 1) % l_pad      # x[h, w+1]
        shift_down = (l_pad - w) % l_pad       # x[h+1, w]

        def _kernel(x_ref, o_ref):
            cc = pl.program_id(0)              # core-split axis ("parallel")
            jj = pl.program_id(1)              # accumulation axis

            @pl.when(jj == 0)
            def _init():
                o_ref[...] = jnp.zeros_like(o_ref)

            # Stream the block in its source dtype, upcast on-chip.
            xv = x_ref[...].astype(jnp.float32)                # (tn, l_pad)

            # Shifted neighbours via XLU rotations (no unaligned slices).
            right = pltpu.roll(xv, shift=shift_right, axis=1)  # x[h, w+1]
            down = pltpu.roll(xv, shift=shift_down, axis=1)    # x[h+1, w]

            x_diff = xv - right
            y_diff = xv - down
            sq = jnp.clip(x_diff * x_diff + y_diff * y_diff, eps, 10000000.0)

            row_start = (cc * bpc + jj) * tn   # logical (unclamped) row base
            is_full = row_start + tn <= n

            # Common path: every row of the tile is a real image -> no mask
            # math at all (spatially invalid lanes are excluded once in the
            # wrapper).  Fold the 8-sublane groups with plain VPU adds; the
            # reshape splits the sublane axis on 8-row boundaries (free view).
            @pl.when(is_full)
            def _full():
                o_ref[...] += sq.reshape(tn // 8, 8, l_pad).sum(axis=0)

            # Tail path (ragged last block / clamped duplicate block): the
            # out-of-range rows may hold non-finite garbage, so SELECT them
            # out (where, not multiply) before folding.  Mask stays after
            # the clip.
            @pl.when(jnp.logical_not(is_full))
            def _tail():
                rows = (jax.lax.broadcasted_iota(jnp.int32, sq.shape, 0)
                        + row_start)
                sq_m = jnp.where(rows < n, sq, 0.0)
                o_ref[...] += sq_m.reshape(tn // 8, 8, l_pad).sum(axis=0)

        def _in_map(cc, jj):
            # Clamp so the (at most one) duplicate step of the second core
            # re-reads a valid block; its rows are fully masked in the tail
            # path, so it contributes exactly zero.
            return (jnp.minimum(cc * bpc + jj, total_blocks - 1), 0)

        partials = pl.pallas_call(
            _kernel,
            out_shape=jax.ShapeDtypeStruct((n_split * 8, l_pad), jnp.float32),
            grid_spec=pltpu.PrefetchScalarGridSpec(
                num_scalar_prefetch=0,
                grid=grid,
                in_specs=[pl.BlockSpec((tn, l_pad), _in_map)],
                out_specs=pl.BlockSpec((8, l_pad), lambda cc, jj: (cc, 0)),
            ),
            compiler_params=pltpu.CompilerParams(
                dimension_semantics=("parallel", "arbitrary"),
                vmem_limit_bytes=vmem_limit,
            ),
        )(xf)

        # Final reduce (tiny): drop last-row / last-column / lane-pad
        # positions once -- mask AFTER the clip, as in the reference -- then
        # take the mean over the valid count.
        lane = jnp.arange(l_pad, dtype=jnp.int32)
        valid = (lane % w < (w - 1)) & (lane // w < (h - 1)) & (lane < l)
        total = jnp.sum(jnp.where(valid[None, :], partials, 0.0))
        return total / jnp.float32(count)

    return tv_loss


def _tv_loss_ref(x, eps=0.001):
    # pure-JAX reference (mirrors the PyTorch forward exactly)
    x = x.astype(jnp.float32)
    base = x[:, :, :-1, :-1]
    x_diff = base - x[:, :, :-1, 1:]
    y_diff = base - x[:, :, 1:, :-1]
    sq = jnp.clip(x_diff * x_diff + y_diff * y_diff, eps, 10000000.0)
    return jnp.mean(sq)


if __name__ == "__main__":
    key = jax.random.PRNGKey(0)
    # small NCHW input consistent with the module: batch=2, channels=4, 16x16
    x = jax.random.normal(key, (2, 4, 16, 16), dtype=jnp.float32)

    tv_loss = make_tv_loss(eps=0.001, beta=2)
    out = jax.block_until_ready(tv_loss(x))

    ref = jax.block_until_ready(_tv_loss_ref(x, eps=0.001))
    np.testing.assert_allclose(np.asarray(out), np.asarray(ref),
                               rtol=1e-5, atol=1e-6)

    print("KERNEL_OK")
</pallas_src>

<mosaic_0001>
module attributes {stable_mosaic.version = 11 : i64} {
  func.func @_kernel(%arg0: i32, %arg1: i32, %arg2: memref<8x256xf32, #tpu.memory_space<vmem>>, %arg3: memref<8x256xf32, #tpu.memory_space<vmem>>) attributes {dimension_semantics = [#tpu.dimension_semantics<parallel>, #tpu.dimension_semantics<arbitrary>], iteration_bounds = array<i64: 2, 1>, scalar_prefetch = 0 : i64, scratch_operands = 0 : i64, tpu.core_type = #tpu.core_type<tc>, window_params = [{transform_indices = @transform_0, window_bounds = array<i64: 8, 256>}, {transform_indices = @transform_1, window_bounds = array<i64: 8, 256>}]} {
    %c0_i32 = arith.constant 0 : i32
    %0 = arith.cmpi eq, %arg1, %c0_i32 : i32
    %1 = arith.extui %0 : i1 to i32
    %c0_i32_0 = arith.constant 0 : i32
    %2 = arith.cmpi ne, %1, %c0_i32_0 : i32
    scf.if %2 {
      %cst_7 = arith.constant 0.000000e+00 : f32
      %25 = vector.broadcast %cst_7 : f32 to vector<8x256xf32>
      %c0_8 = arith.constant 0 : index
      %c0_9 = arith.constant 0 : index
      %26 = vector.load %arg3[%c0_8, %c0_9] : memref<8x256xf32, #tpu.memory_space<vmem>>, vector<8x256xf32>
      tpu.vector_store %arg3[%c0_8, %c0_9], %25 {strides = array<i32>} : memref<8x256xf32, #tpu.memory_space<vmem>>, vector<8x256xf32>,
    } else {
    }
    %c0 = arith.constant 0 : index
    %c0_1 = arith.constant 0 : index
    %3 = vector.load %arg2[%c0, %c0_1] : memref<8x256xf32, #tpu.memory_space<vmem>>, vector<8x256xf32>
    %c255_i32 = arith.constant 255 : i32
    %4 = tpu.dynamic_rotate %3 by %c255_i32 dim 1 : vector<8x256xf32>, i32 -> vector<8x256xf32>
    %c240_i32 = arith.constant 240 : i32
    %5 = tpu.dynamic_rotate %3 by %c240_i32 dim 1 : vector<8x256xf32>, i32 -> vector<8x256xf32>
    %6 = arith.subf %3, %4 : vector<8x256xf32>
    %7 = arith.subf %3, %5 : vector<8x256xf32>
    %8 = arith.mulf %6, %6 : vector<8x256xf32>
    %9 = arith.mulf %7, %7 : vector<8x256xf32>
    %10 = arith.addf %8, %9 : vector<8x256xf32>
    %cst = arith.constant 1.000000e-03 : f32
    %cst_2 = arith.constant 1.000000e+07 : f32
    %11 = vector.broadcast %cst : f32 to vector<8x256xf32>
    %12 = arith.maximumf %11, %10 : vector<8x256xf32>
    %13 = vector.broadcast %cst_2 : f32 to vector<8x256xf32>
    %14 = arith.minimumf %13, %12 : vector<8x256xf32>
    %c1_i32 = arith.constant 1 : i32
    %15 = arith.muli %arg0, %c1_i32 : i32
    %16 = arith.addi %15, %arg1 : i32
    %c8_i32 = arith.constant 8 : i32
    %17 = arith.muli %16, %c8_i32 : i32
    %c8_i32_3 = arith.constant 8 : i32
    %18 = arith.addi %17, %c8_i32_3 : i32
    %c8_i32_4 = arith.constant 8 : i32
    %19 = arith.cmpi sle, %18, %c8_i32_4 : i32
    %20 = arith.extui %19 : i1 to i32
    %c0_i32_5 = arith.constant 0 : i32
    %21 = arith.cmpi ne, %20, %c0_i32_5 : i32
    scf.if %21 {
      %c0_7 = arith.constant 0 : index
      %c0_8 = arith.constant 0 : index
      %25 = vector.load %arg3[%c0_7, %c0_8] : memref<8x256xf32, #tpu.memory_space<vmem>>, vector<8x256xf32>
      %26 = vector.shape_cast %14 : vector<8x256xf32> to vector<1x8x256xf32>
      %cst_9 = arith.constant dense<0.000000e+00> : vector<8x256xf32>
      %27 = vector.multi_reduction <add>, %26, %cst_9 [0] : vector<1x8x256xf32> to vector<8x256xf32>
      %28 = arith.addf %25, %27 : vector<8x256xf32>
      %c0_10 = arith.constant 0 : index
      %c0_11 = arith.constant 0 : index
      %29 = vector.load %arg3[%c0_10, %c0_11] : memref<8x256xf32, #tpu.memory_space<vmem>>, vector<8x256xf32>
      tpu.vector_store %arg3[%c0_10, %c0_11], %28 {strides = array<i32>} : memref<8x256xf32, #tpu.memory_space<vmem>>, vector<8x256xf32>,
    } else {
    }
    %true = arith.constant true
    %22 = arith.xori %19, %true : i1
    %23 = arith.extui %22 : i1 to i32
    %c0_i32_6 = arith.constant 0 : i32
    %24 = arith.cmpi ne, %23, %c0_i32_6 : i32
    scf.if %24 {
      %25 = tpu.iota {dimensions = array<i32: 0>} : vector<8x256xi32>
      %26 = vector.broadcast %17 : i32 to vector<8x256xi32>
      %27 = arith.addi %25, %26 : vector<8x256xi32>
      %c8_i32_7 = arith.constant 8 : i32
      %28 = vector.broadcast %c8_i32_7 : i32 to vector<8x256xi32>
      %29 = arith.cmpi slt, %27, %28 : vector<8x256xi32>
      %cst_8 = arith.constant 0.000000e+00 : f32
      %30 = vector.broadcast %cst_8 : f32 to vector<8x256xf32>
      %31 = arith.select %29, %14, %30 : vector<8x256xi1>, vector<8x256xf32>
      %c0_9 = arith.constant 0 : index
      %c0_10 = arith.constant 0 : index
      %32 = vector.load %arg3[%c0_9, %c0_10] : memref<8x256xf32, #tpu.memory_space<vmem>>, vector<8x256xf32>
      %33 = vector.shape_cast %31 : vector<8x256xf32> to vector<1x8x256xf32>
      %cst_11 = arith.constant dense<0.000000e+00> : vector<8x256xf32>
      %34 = vector.multi_reduction <add>, %33, %cst_11 [0] : vector<1x8x256xf32> to vector<8x256xf32>
      %35 = arith.addf %32, %34 : vector<8x256xf32>
      %c0_12 = arith.constant 0 : index
      %c0_13 = arith.constant 0 : index
      %36 = vector.load %arg3[%c0_12, %c0_13] : memref<8x256xf32, #tpu.memory_space<vmem>>, vector<8x256xf32>
      tpu.vector_store %arg3[%c0_12, %c0_13], %35 {strides = array<i32>} : memref<8x256xf32, #tpu.memory_space<vmem>>, vector<8x256xf32>,
    } else {
    }
    return
  }
  func.func @transform_0(%arg0: i32, %arg1: i32) -> (i32, i32) {
    %c1_i32 = arith.constant 1 : i32
    %0 = arith.muli %arg0, %c1_i32 : i32
    %1 = arith.addi %0, %arg1 : i32
    %c0_i32 = arith.constant 0 : i32
    %2 = arith.minsi %1, %c0_i32 : i32
    %c0_i32_0 = arith.constant 0 : i32
    %c0_i32_1 = arith.constant 0 : i32
    return %2, %c0_i32_0 : i32, i32
  }
  func.func @transform_1(%arg0: i32, %arg1: i32) -> (i32, i32) {
    %c0_i32 = arith.constant 0 : i32
    %c0_i32_0 = arith.constant 0 : i32
    return %arg0, %c0_i32 : i32, i32
  }
}

</mosaic_0001>

<llo_original>
// kernel: tpu_custom_call.1
$region0: #{tpu_custom_call.1}
  #allocation0 [shape = 'u32[]', space=smem, size = 0x4, offset = 0x4, fixed_abs, tag = 'smem constant byte address 0x4 - core index']
  #allocation1 [shape = 'u32[144,128]{1,0:T(1,128)}', space=vmem, size = 0x12000, scoped, tag = 'internal scratch']
  %s0 = inlined_call_operand.hbm [shape: f32[8,256], index: 0, kind: input, shape index: {}]
  %s1 = inlined_call_operand.hbm [shape: f32[16,256], index: 1, kind: output, shape index: {}]
  %s2 = sld [smem:[#allocation0]]
  $region53: #{tpu_custom_call.1} parent=0
    _
  %s4 = ssub.s32 1, %s2
  %s5 = scalar_select 0, %s4, %s2
  $region1: #{tpu_custom_call.1} parent=0
    #allocation2 [shape = 'u8[16384]{0}', space=vmem, size = 0x4000, scoped, tag = 'input window, operand 0']
    #allocation3 [shape = 's32[2]{0}', space=sflag, size = 0x8, scoped, tag = 'scoped memory for tpu_custom_call.1']
    #allocation4 [shape = 's32[2]{0}', space=sflag, size = 0x8, scoped, tag = 'scoped memory for tpu_custom_call.1']
    #allocation5 [shape = 'u8[16384]{0}', space=vmem, size = 0x4000, scoped, tag = 'output window, operand 0']
    %6 = vsyncpa [#allocation3], 0
    %s7 = scalar_lea.sflag [#allocation3], 1
    %8 = vsyncpa %s7, 0
    %9 = vsyncpa [#allocation4], 0
    %s10 = scalar_lea.sflag [#allocation4], 1
    %11 = vsyncpa %s10, 0
    loop: start=0, step=1, limit=4
    $region2: #{tpu_custom_call.1} parent=1 // loop_pre_header
      _
    $region3: #{tpu_custom_call.1} parent=1 // loop_header
      %s13 = sphi 0, %s17
      %p14 = scmp.ge.s32.totalorder %s13, 4
      %s20 = sphi 0, %s32
      %s21 = sphi 0, %s28
      %s22 = sphi 0, %s20
      %s23 = sphi 0, %s21
      %s24 = sphi 0, %s22
      %s25 = sphi 0, %s23
      %s41 = sphi 0, %s43
      %s44 = sphi 0, %s41
      %s45 = sphi 0, %s44
      %s61 = sphi 0, %s45
      %s67 = sphi 0, %s69
      %s70 = sphi 0, %s67
      %s71 = sphi 0, %s70
      %s87 = sphi 0, %s71
    $region4: #{tpu_custom_call.1} parent=1 // loop_header_branch
      %16 = sbr.rel (%p14) target = $region8
    $region5: #{tpu_custom_call.1} parent=1 // loop_body
      %s18 = ssub.s32 %s13, 1
      %s19 = ssub.s32 %s13, 2
      %s26 = sadd.s32 1, %s21
      %p27 = scmp.ge.s32.totalorder %s26, 1
      %s28 = scalar_select %p27, 0, %s26
      %s29 = sadd.s32 1, %s20
      %s30 = scalar_select %p27, %s29, %s20
      %p31 = scmp.ge.s32.totalorder %s30, 2
      %s32 = scalar_select %p31, 0, %s30
      %s33 = sadd.s32 %s20, %s21
      %p34 = scmp.lt.s32.totalorder %s33, 0
      %s35 = scalar_select %p34, %s33, 0
      %s36 = sadd.s32 %s32, %s28
      %p37 = scmp.lt.s32.totalorder %s36, 0
      %s38 = scalar_select %p37, %s36, 0
      %s39 = ssub.s32 %s35, %s38
      %p40 = scmp.eq.s32.totalorder %s39, 0
      %s42 = sadd.s32 %s41, 1
      %s43 = scalar_select %p40, %s41, %s42
      %p46 = pneg %p40
      %p47 = scmp.eq.s32.totalorder %s13, 1
      %p48 = por %p46, %p47
      %p49 = scmp.ne.s32.totalorder %s41, %s44
      %p50 = scmp.eq.s32.totalorder %s13, 0
      %p51 = por %p49, %p50
      %p52 = scmp.ne.s32.totalorder %s41, %s44
      %p53 = scmp.eq.s32.totalorder %s18, 1
      %p54 = por %p52, %p53
      %p55 = scmp.ne.s32.totalorder %s44, %s45
      %p56 = scmp.eq.s32.totalorder %s18, 0
      %p57 = por %p55, %p56
      %p58 = scmp.ne.s32.totalorder %s44, %s45
      %p59 = scmp.eq.s32.totalorder %s19, 1
      %p60 = por %p58, %p59
      %p62 = scmp.ne.s32.totalorder %s45, %s61
      %p63 = scmp.eq.s32.totalorder %s19, 0
      %p64 = por %p62, %p63
      %s65 = ssub.s32 %s20, %s32
      %p66 = scmp.eq.s32.totalorder %s65, 0
      %s68 = sadd.s32 %s67, 1
      %s69 = scalar_select %p66, %s67, %s68
      %p72 = pneg %p66
      %p73 = scmp.eq.s32.totalorder %s13, 1
      %p74 = por %p72, %p73
      %p75 = scmp.ne.s32.totalorder %s67, %s70
      %p76 = scmp.eq.s32.totalorder %s13, 0
      %p77 = por %p75, %p76
      %p78 = scmp.ne.s32.totalorder %s67, %s70
      %p79 = scmp.eq.s32.totalorder %s18, 1
      %p80 = por %p78, %p79
      %p81 = scmp.ne.s32.totalorder %s70, %s71
      %p82 = scmp.eq.s32.totalorder %s18, 0
      %p83 = por %p81, %p82
      %p84 = scmp.ne.s32.totalorder %s70, %s71
      %p85 = scmp.eq.s32.totalorder %s19, 1
      %p86 = por %p84, %p85
      %p88 = scmp.ne.s32.totalorder %s71, %s87
      %p89 = scmp.eq.s32.totalorder %s19, 0
      %p90 = por %p88, %p89
      %p91 = scmp.le.s32.totalorder 1, %s13
      %p92 = scmp.lt.s32.totalorder %s13, 3
      %p93 = pnand %p91, %p92
      %p94 = pneg %p93
      // Predicated region
      $region9: #{tpu_custom_call.1} parent=5 // pred_check
        _
      $region10: #{tpu_custom_call.1} parent=5 // pred_check_branch
        %96 = sbr.rel (%p93) target = $region12
      $region11: #{tpu_custom_call.1} parent=5 // pred_region
        %s97 = ssub.s32 %s13, 1
      $region12: #{tpu_custom_call.1} parent=5 // pred_fallthru
        _
      %p98 = scmp.lt.s32.totalorder %s13, 2
      // Predicated region
      $region13: #{tpu_custom_call.1} parent=5 // pred_check
        %p99 = pneg %p98
      $region14: #{tpu_custom_call.1} parent=5 // pred_check_branch
        %101 = sbr.rel (%p99) target = $region16
      $region15: #{tpu_custom_call.1} parent=5 // pred_region
        // Predicated region
        $region17: #{tpu_custom_call.1} parent=15 // pred_check
          %p102 = pneg %p51
        $region18: #{tpu_custom_call.1} parent=15 // pred_check_branch
          %104 = sbr.rel (%p102) target = $region20
        $region19: #{tpu_custom_call.1} parent=15 // pred_region
          %s105 = sand.u32 %s41, 1
          %s106 = scalar_lea.sflag [#allocation3], %s105
          %s107 = sand.u32 %s41, 1
          %s108 = smul.addr %s107, 16
          %s109 = scalar_lea.vmem [#allocation2], %s108
          %s110 = sadd.s32 %s20, %s21
          %p111 = scmp.lt.s32.totalorder %s110, 0
          %s112 = scalar_select %p111, %s110, 0
          %s114 = ssub.s32 256, 256
          %115 = vsyncadd %s106, %s114
          %s116 = smul.addr %s112, 2
          %s117 = smul.addr %s116, 128
          %s118 = scalar_lea.hbm %s0, %s117
          %s120 = sshll.u32 %s109, 4
          %s121 = int_to_ptr.vmem [resolvable:$true] %s120
          %123 = dma.hbm_to_vmem [thread:$0]  %s118, 256, %s121, %s106
        $region20: #{tpu_custom_call.1} parent=15 // pred_fallthru
          _
      $region16: #{tpu_custom_call.1} parent=5 // pred_fallthru
        _
      %p124 = scmp.le.s32.totalorder 1, %s13
      %p125 = scmp.lt.s32.totalorder %s13, 3
      %p126 = pnand %p124, %p125
      %p127 = pneg %p126
      // Predicated region
      $region21: #{tpu_custom_call.1} parent=5 // pred_check
        _
      $region22: #{tpu_custom_call.1} parent=5 // pred_check_branch
        %129 = sbr.rel (%p126) target = $region24
      $region23: #{tpu_custom_call.1} parent=5 // pred_region
        %s130 = ssub.s32 %s13, 1
        %s131 = sand.u32 %s44, 1
        %s132 = scalar_lea.sflag [#allocation3], %s131
        %s133 = sand.u32 %s44, 1
        %s134 = smul.addr %s133, 16
        %s135 = scalar_lea.vmem [#allocation2], %s134
        // Predicated region
        $region25: #{tpu_custom_call.1} parent=23 // pred_check
          %p136 = pneg %p57
        $region26: #{tpu_custom_call.1} parent=23 // pred_check_branch
          %138 = sbr.rel (%p136) target = $region28
        $region27: #{tpu_custom_call.1} parent=23 // pred_region
          %139 = dma.done %s132, 256
        $region28: #{tpu_custom_call.1} parent=23 // pred_fallthru
          _
        %s140 = sand.u32 %s44, 1
        %s141 = scalar_lea.sflag [#allocation3], %s140
        %s142 = sand.u32 %s44, 1
        %s143 = smul.addr %s142, 16
        %s144 = scalar_lea.vmem [#allocation2], %s143
        %p145 = pneg %p57
        %p146 = pneg %p54
        %p147 = pneg %p83
        %p148 = pneg %p80
        %s149 = sand.u32 %s70, 1
        %s150 = scalar_lea.sflag [#allocation4], %s149
        %s151 = sand.u32 %s70, 1
        %s152 = smul.addr %s151, 16
        %s153 = scalar_lea.vmem [#allocation5], %s152
        %s154 = sadd.s32 %s22, %s23
        %p155 = scmp.lt.s32.totalorder %s154, 0
        %s156 = scalar_select %p155, %s154, 0
        %p157 = scmp.eq.s32.totalorder %s23, 0
        // Predicated region
        $region29: #{tpu_custom_call.1} parent=23 // pred_check
          %p158 = pneg %p157
        $region30: #{tpu_custom_call.1} parent=23 // pred_check_branch
          %160 = sbr.rel (%p158) target = $region32
        $region31: #{tpu_custom_call.1} parent=23 // pred_region
          %161 = vst [vmem:[%s153] sm:$0xff] 0.0
          %162 = vst [vmem:[%s153 + $0x8] sm:$0xff] 0.0
        $region32: #{tpu_custom_call.1} parent=23 // pred_fallthru
          _
        %v163 = vld [vmem:[%s135] sm:$0xff]
        %v164 = vld [vmem:[%s135 + $0x8] sm:$0xff]
        %165 = vrot.lane.b32.xlu0 %v163, 127
        %v166 = vpop.permute.xlu0 %165
        %167 = vrot.lane.b32.xlu0 %v164, 127
        %v168 = vpop.permute.xlu0 %167
        %v169 = vlaneseq
        %v170 = vand.u32 %v169, 127
        %vm171 = vcmp.lt.s32.totalorder %v170, 127
        %v172 = vsel %vm171, %v166, %v168
        %v173 = vsel %vm171, %v168, %v166
        %174 = vrot.lane.b32.xlu0 %v163, 112
        %v175 = vpop.permute.xlu0 %174
        %176 = vrot.lane.b32.xlu0 %v164, 112
        %v177 = vpop.permute.xlu0 %176
        %vm178 = vcmp.lt.s32.totalorder %v170, 112
        %v179 = vsel %vm178, %v175, %v177
        %v180 = vsel %vm178, %v177, %v175
        %v181 = vsub.f32 %v163, %v172
        %v182 = vsub.f32 %v164, %v173
        %v183 = vsub.f32 %v163, %v179
        %v184 = vsub.f32 %v164, %v180
        %v185 = vmul.f32 %v181, %v181
        %v186 = vmul.f32 %v182, %v182
        %v187 = vmul.f32 %v183, %v183
        %v188 = vmul.f32 %v184, %v184
        %v189 = vadd.f32 %v185, %v187
        %v190 = vadd.f32 %v186, %v188
        %v191 = vmax.f32 %v189, 0.001
        %v192 = vmax.f32 %v190, 0.001
        %v193 = vmin.f32 %v191, 10000000.0
        %v194 = vmin.f32 %v192, 10000000.0
        %s195 = sadd.s32 %s22, %s23
        %s196 = smul.u32 %s195, 8
        %s197 = sadd.s32 %s196, 8
        %p198 = scmp.le.s32.totalorder %s197, 8
        // Predicated region
        $region33: #{tpu_custom_call.1} parent=23 // pred_check
          %p199 = pneg %p198
        $region34: #{tpu_custom_call.1} parent=23 // pred_check_branch
          %201 = sbr.rel (%p199) target = $region36
        $region35: #{tpu_custom_call.1} parent=23 // pred_region
          %v202 = vld [vmem:[%s153] sm:$0xff]
          %v203 = vld [vmem:[%s153 + $0x8] sm:$0xff]
          %v204 = vadd.f32 %v193, 0.0
          %v205 = vadd.f32 %v194, 0.0
          %v206 = vadd.f32 %v202, %v204
          %v207 = vadd.f32 %v203, %v205
          %208 = vst [vmem:[%s153] sm:$0xff] %v206
          %209 = vst [vmem:[%s153 + $0x8] sm:$0xff] %v207
        $region36: #{tpu_custom_call.1} parent=23 // pred_fallthru
          _
        %p210 = scmp.gt.s32.totalorder %s197, 8
        // Predicated region
        $region37: #{tpu_custom_call.1} parent=23 // pred_check
          %p211 = pneg %p210
        $region38: #{tpu_custom_call.1} parent=23 // pred_check_branch
          %213 = sbr.rel (%p211) target = $region40
        $region39: #{tpu_custom_call.1} parent=23 // pred_region
          %v214 = vlaneseq
          %v215 = vshrl.u32 %v214, 7
          %v216 = vstv %s196
          %v217 = vadd.s32 %v215, %v216
          %vm218 = vcmp.lt.s32.totalorder %v217, 8
          %v219 = vsel %vm218, %v193, 0.0
          %v220 = vsel %vm218, %v194, 0.0
          %v221 = vld [vmem:[%s153] sm:$0xff]
          %v222 = vld [vmem:[%s153 + $0x8] sm:$0xff]
          %v223 = vadd.f32 %v219, 0.0
          %v224 = vadd.f32 %v220, 0.0
          %v225 = vadd.f32 %v221, %v223
          %v226 = vadd.f32 %v222, %v224
          %227 = vst [vmem:[%s153] sm:$0xff] %v225
          %228 = vst [vmem:[%s153 + $0x8] sm:$0xff] %v226
        $region40: #{tpu_custom_call.1} parent=23 // pred_fallthru
          _
        %s229 = sand.u32 %s70, 1
        %s230 = scalar_lea.sflag [#allocation4], %s229
        %s231 = sand.u32 %s70, 1
        %s232 = smul.addr %s231, 16
        %s233 = scalar_lea.vmem [#allocation5], %s232
        // Predicated region
        $region41: #{tpu_custom_call.1} parent=23 // pred_check
          %p234 = pneg %p80
        $region42: #{tpu_custom_call.1} parent=23 // pred_check_branch
          %236 = sbr.rel (%p234) target = $region44
        $region43: #{tpu_custom_call.1} parent=23 // pred_region
          %s238 = ssub.s32 256, 256
          %239 = vsyncadd %s230, %s238
          %s240 = smul.addr %s22, 2
          %s241 = smul.addr %s240, 128
          %s242 = scalar_lea.hbm %s1, %s241
          %s244 = sshll.u32 %s233, 4
          %s245 = int_to_ptr.vmem [resolvable:$true] %s244
          %247 = dma.vmem_to_hbm [thread:$0]  %s245, 256, %s242, %s230
        $region44: #{tpu_custom_call.1} parent=23 // pred_fallthru
          _
      $region24: #{tpu_custom_call.1} parent=5 // pred_fallthru
        _
      %p248 = scmp.le.s32.totalorder 2, %s13
      // Predicated region
      $region45: #{tpu_custom_call.1} parent=5 // pred_check
        %p249 = pneg %p248
      $region46: #{tpu_custom_call.1} parent=5 // pred_check_branch
        %251 = sbr.rel (%p249) target = $region48
      $region47: #{tpu_custom_call.1} parent=5 // pred_region
        %s252 = ssub.s32 %s13, 2
        // Predicated region
        $region49: #{tpu_custom_call.1} parent=47 // pred_check
          %p253 = pneg %p86
        $region50: #{tpu_custom_call.1} parent=47 // pred_check_branch
          %255 = sbr.rel (%p253) target = $region52
        $region51: #{tpu_custom_call.1} parent=47 // pred_region
          %s256 = sand.u32 %s71, 1
          %s257 = scalar_lea.sflag [#allocation4], %s256
          %s258 = sand.u32 %s71, 1
          %s259 = smul.addr %s258, 16
          %s260 = scalar_lea.vmem [#allocation5], %s259
          %261 = dma.done %s257, 256
        $region52: #{tpu_custom_call.1} parent=47 // pred_fallthru
          _
      $region48: #{tpu_custom_call.1} parent=5 // pred_fallthru
        _
    $region6: #{tpu_custom_call.1} parent=1 // loop_footer
      %s17 = sadd.s32 1, %s13
    $region7: #{tpu_custom_call.1} parent=1 // loop_footer_branch
      %12 = sbr.rel target = $region3
    $region8: #{tpu_custom_call.1} parent=1 // loop_exit
      _
    %262 = vsyncpa [#allocation3], 1
    %s263 = scalar_lea.sflag [#allocation3], 1
    %264 = vsyncpa %s263, 1
    %265 = vsyncpa [#allocation4], 1
    %s266 = scalar_lea.sflag [#allocation4], 1
    %267 = vsyncpa %s266, 1

</llo_original>
